<compile_context>
chip_gen: v7x
topology: tpu7x:2x2x1
jax: 0.10.0
libtpu: 0.0.40
codegen_flags: <defaults>
</compile_context>

<pallas_src>
import functools

import jax
import jax.numpy as jnp
from jax.experimental import pallas as pl
from jax.experimental.pallas import tpu as pltpu

_LANE = 128
_MIN_PARALLEL = 4   # 2 TensorCores (v7x megacore) x 2 blocks each for double-buffering


def _round_up(a, b):
    return (a + b - 1) // b * b


def _sublane(dtype):
    # dtype-aware sublane multiple: 8 (f32), 16 (bf16/f16), 32 (int8/fp8)
    return max(8, 32 // jnp.dtype(dtype).itemsize)


def _per_buffer_budget_bytes():
    """Per-pipeline-buffer VMEM budget.

    ~2 MiB per buffer already reaches ~85%+ of the HBM roofline for f32 elementwise
    kernels.  On 128 MiB-VMEM parts (v5e/v6e) allow 4 MiB (fewer grid steps, less
    per-step overhead); on v7x (64 MiB physical) keep 2 MiB so double-buffered
    in + out + params leave plenty of headroom.
    """
    try:
        vmem = pltpu.get_tpu_info().vmem_capacity_bytes
    except Exception:
        vmem = 64 * 1024 * 1024
    return (4 << 20) if vmem >= 96 * 1024 * 1024 else (2 << 20)


def _compiler_params(dim_sem, block_bytes):
    # Tight scoped-VMEM limit: 2x double-buffered input + output tiles + params
    # + margin (honest accounting instead of a blanket 48 MiB).
    needed = 4 * block_bytes + (2 << 20)
    vmem_limit = int(min(max(needed, 8 << 20), 32 << 20))
    return pltpu.CompilerParams(
        dimension_semantics=dim_sem, vmem_limit_bytes=vmem_limit)


# ----------------------------- kernels ---------------------------------------


def _ln_channels_first_kernel(x_ref, w_ref, b_ref, o_ref, *, eps, inv_c):
    # x_ref: (nb, C, t) with C on sublanes and spatial on lanes; w/b: (1, C, 1).
    # One pass over the tile: sum(x) and sum(x*x) -> var = E[x^2] - mu^2 (f32).
    x = x_ref[...].astype(jnp.float32)
    mu = jnp.sum(x, axis=1, keepdims=True) * inv_c        # cross-sublane reduce (XLU)
    ex2 = jnp.sum(x * x, axis=1, keepdims=True) * inv_c
    var = jnp.maximum(ex2 - mu * mu, 0.0)                 # biased var (torch semantics)
    inv = jax.lax.rsqrt(var + eps)
    y = (x - mu) * inv * w_ref[...].astype(jnp.float32) + b_ref[...].astype(jnp.float32)
    o_ref[...] = y.astype(o_ref.dtype)


def _ln_rows_kernel(x_ref, w_ref, b_ref, o_ref, *, eps, inv_c):
    # x_ref: (br, C); normalize over the trailing lane axis. w/b: (1, C).
    x = x_ref[...].astype(jnp.float32)
    mu = jnp.sum(x, axis=-1, keepdims=True) * inv_c
    ex2 = jnp.sum(x * x, axis=-1, keepdims=True) * inv_c
    var = jnp.maximum(ex2 - mu * mu, 0.0)
    inv = jax.lax.rsqrt(var + eps)
    y = (x - mu) * inv * w_ref[...].astype(jnp.float32) + b_ref[...].astype(jnp.float32)
    o_ref[...] = y.astype(o_ref.dtype)


def _ln_rows_packed_kernel(x_ref, w_ref, b_ref, gr_ref, gc_ref, o_ref, *, eps, inv_group):
    # x_ref: (br, G) with G = k*C -- k independent channel groups packed per row.
    # Block-diagonal ones mask built from two tiny group-id vectors (no (G,G) HBM
    # input / per-step DMA): m[i, j] = 1 iff lanes i and j belong to the same group.
    x = x_ref[...].astype(jnp.float32)
    m = (gr_ref[...] == gc_ref[...]).astype(jnp.float32)   # (G,1)==(1,G) -> (G,G)
    s1 = jnp.dot(x, m, preferred_element_type=jnp.float32,
                 precision=jax.lax.Precision.HIGHEST) * inv_group
    s2 = jnp.dot(x * x, m, preferred_element_type=jnp.float32,
                 precision=jax.lax.Precision.HIGHEST) * inv_group
    # TODO(synk): if this packed path ever flips MXU-bound on v5e, stack [x; x*x]
    #             into a single (2*br, G) operand so the MXU drains once per block.
    var = jnp.maximum(s2 - s1 * s1, 0.0)
    inv = jax.lax.rsqrt(var + eps)
    y = (x - s1) * inv * w_ref[...].astype(jnp.float32) + b_ref[...].astype(jnp.float32)
    o_ref[...] = y.astype(o_ref.dtype)


# ----------------------------- wrappers ---------------------------------------


def _layernorm_channels_first(x, weight, bias, eps):
    """LayerNorm over the channel axis of an NCHW tensor -- no transposes."""
    N, C, H, W = x.shape
    HW = H * W
    itemsize = jnp.dtype(x.dtype).itemsize
    x3 = x.reshape(N, C, HW)                    # contiguous view, no data movement
    w3 = weight.reshape(1, C, 1)
    b3 = bias.reshape(1, C, 1)

    budget = _per_buffer_budget_bytes()
    row_bytes = C * itemsize                    # bytes per lane column (all channels)

    # Lane tile over the spatial axis: multiple of 128 or the full dim.
    if HW <= _LANE:
        t = HW
    else:
        t_cap = max(_LANE, (budget // row_bytes) // _LANE * _LANE)
        t = HW if t_cap >= HW else t_cap

    # Fold batch rows into the block while staying under the per-buffer budget.
    nb = max(1, min(N, budget // max(1, t * row_bytes)))

    def n_steps(nb_, t_):
        return pl.cdiv(N, nb_) * pl.cdiv(HW, t_)

    # Guarantee enough grid steps to feed both v7x TensorCores and double-buffer.
    while nb > 1 and n_steps(nb, t) < _MIN_PARALLEL:
        nb -= 1
    while (n_steps(nb, t) < _MIN_PARALLEL and t > _LANE
           and (t // 2) // _LANE * _LANE >= _LANE):
        t = (t // 2) // _LANE * _LANE

    grid = (pl.cdiv(N, nb), pl.cdiv(HW, t))     # ragged batch/lane tails are masked
    block_bytes = nb * C * t * itemsize

    out = pl.pallas_call(
        functools.partial(_ln_channels_first_kernel, eps=eps, inv_c=1.0 / C),
        out_shape=jax.ShapeDtypeStruct((N, C, HW), x.dtype),
        grid=grid,
        in_specs=[
            pl.BlockSpec((nb, C, t), lambda n, j: (n, 0, j)),
            pl.BlockSpec((1, C, 1), lambda n, j: (0, 0, 0)),
            pl.BlockSpec((1, C, 1), lambda n, j: (0, 0, 0)),
        ],
        out_specs=pl.BlockSpec((nb, C, t), lambda n, j: (n, 0, j)),
        compiler_params=_compiler_params(("parallel", "parallel"), block_bytes),
    )(x3, w3, b3)
    return out.reshape(N, C, H, W)


def _layernorm_channels_last(x, weight, bias, eps):
    """LayerNorm over the trailing axis of a (..., C) tensor."""
    C = int(weight.shape[0])
    orig_shape = x.shape
    itemsize = jnp.dtype(x.dtype).itemsize
    sub = _sublane(x.dtype)
    x2 = x.reshape(-1, C)
    R = x2.shape[0]

    budget = _per_buffer_budget_bytes()
    # Lane packing whenever C <= 64: k = 128 // C groups per row -> lane-dense stores
    # even for C = 36 / 48 / 96-style widths (ragged row counts padded).
    k = _LANE // C if C <= _LANE // 2 else 1

    if k > 1:
        G = k * C
        R_pad = _round_up(R, k)
        xk = jnp.pad(x2, ((0, R_pad - R), (0, 0))) if R_pad != R else x2
        # TODO(synk): the R % k remainder is handled by a small jnp.pad copy; a
        #             dedicated ragged tail call would avoid that extra HBM traffic.
        Rg = R_pad // k
        xg = xk.reshape(Rg, G)                  # contiguous view when no padding
    else:
        G, Rg, xg = C, R, x2

    row_bytes = G * itemsize
    br = max(sub, (budget // row_bytes) // sub * sub)
    br = min(br, _round_up(Rg, sub))
    # >= _MIN_PARALLEL grid steps (two v7x TensorCores, double-buffered) when possible.
    while br > sub and pl.cdiv(Rg, br) < _MIN_PARALLEL:
        br = max(sub, _round_up(br // 2, sub))

    grid = (pl.cdiv(Rg, br),)                   # ragged row tail is masked
    block_bytes = br * G * itemsize
    cp = _compiler_params(("parallel",), block_bytes)

    if k > 1:
        wg = jnp.tile(weight.reshape(1, C).astype(jnp.float32), (1, k))
        bg = jnp.tile(bias.reshape(1, C).astype(jnp.float32), (1, k))
        gid = jnp.arange(G, dtype=jnp.int32) // C
        gid_r = gid.reshape(G, 1)
        gid_c = gid.reshape(1, G)
        y = pl.pallas_call(
            functools.partial(_ln_rows_packed_kernel, eps=eps, inv_group=1.0 / C),
            out_shape=jax.ShapeDtypeStruct((Rg, G), x.dtype),
            grid=grid,
            in_specs=[
                pl.BlockSpec((br, G), lambda i: (i, 0)),
                pl.BlockSpec((1, G), lambda i: (0, 0)),
                pl.BlockSpec((1, G), lambda i: (0, 0)),
                pl.BlockSpec((G, 1), lambda i: (0, 0)),
                pl.BlockSpec((1, G), lambda i: (0, 0)),
            ],
            out_specs=pl.BlockSpec((br, G), lambda i: (i, 0)),
            compiler_params=cp,
        )(xg, wg, bg, gid_r, gid_c)
        y = y.reshape(R_pad, C)
        if R_pad != R:
            y = y[:R]
    else:
        w2 = weight.reshape(1, C)
        b2 = bias.reshape(1, C)
        y = pl.pallas_call(
            functools.partial(_ln_rows_kernel, eps=eps, inv_c=1.0 / C),
            out_shape=jax.ShapeDtypeStruct((Rg, G), x.dtype),
            grid=grid,
            in_specs=[
                pl.BlockSpec((br, G), lambda i: (i, 0)),
                pl.BlockSpec((1, G), lambda i: (0, 0)),
                pl.BlockSpec((1, G), lambda i: (0, 0)),
            ],
            out_specs=pl.BlockSpec((br, G), lambda i: (i, 0)),
            compiler_params=cp,
        )(x2, w2, b2)
    return y.reshape(orig_shape)


class LayerNormPallas:
    """Pallas port of the ConvNeXt LayerNorm used throughout self_net."""

    def __init__(self, normalized_shape, eps=1e-6, data_format="channels_last"):
        if data_format not in ["channels_last", "channels_first"]:
            raise NotImplementedError
        self.normalized_shape = int(normalized_shape)
        self.eps = float(eps)
        self.data_format = data_format
        # deterministic init (same as nn.Parameter(torch.ones/zeros))
        self.weight = jnp.ones((self.normalized_shape,), dtype=jnp.float32)
        self.bias = jnp.zeros((self.normalized_shape,), dtype=jnp.float32)

    def __call__(self, x):
        C = self.normalized_shape
        if self.data_format == "channels_last":
            assert x.shape[-1] == C
            return _layernorm_channels_last(x, self.weight, self.bias, self.eps)
        else:
            assert x.shape[1] == C
            return _layernorm_channels_first(x, self.weight, self.bias, self.eps)


# ----------------------------- references & demo -------------------------------


def _ref_channels_first(x, w, b, eps):
    u = x.mean(axis=1, keepdims=True)
    s = ((x - u) ** 2).mean(axis=1, keepdims=True)
    xn = (x - u) / jnp.sqrt(s + eps)
    return w[None, :, None, None] * xn + b[None, :, None, None]


def _ref_channels_last(x, w, b, eps):
    u = x.mean(axis=-1, keepdims=True)
    s = ((x - u) ** 2).mean(axis=-1, keepdims=True)
    xn = (x - u) / jnp.sqrt(s + eps)
    return xn * w + b


if __name__ == "__main__":
    key = jax.random.PRNGKey(0)
    k1, k2, k3, k4, k5, k6 = jax.random.split(key, 6)
    TOL = dict(atol=1e-4, rtol=1e-4)

    # 1) channels_first (GMHPA norm1/norm2): NCHW, normalize over channels.
    C1 = 64
    x_cf = jax.random.normal(k1, (2, C1, 16, 16), dtype=jnp.float32)
    ln_cf = LayerNormPallas(C1, eps=1e-6, data_format="channels_first")
    y_cf = jax.block_until_ready(ln_cf(x_cf))
    assert y_cf.shape == x_cf.shape
    assert jnp.allclose(y_cf, _ref_channels_first(x_cf, ln_cf.weight, ln_cf.bias, ln_cf.eps), **TOL)

    # 2) channels_first with ragged spatial size (HW=144) and C=36 (= group_size +
    #    num_classes in group_aggregation_bridge), non-trivial affine params.
    C2 = 36
    x_cf2 = jax.random.normal(k2, (2, C2, 12, 12), dtype=jnp.float32)
    ln_cf2 = LayerNormPallas(C2, eps=1e-6, data_format="channels_first")
    ln_cf2.weight = 1.0 + 0.05 * jnp.arange(C2, dtype=jnp.float32)
    ln_cf2.bias = 0.01 * jnp.arange(C2, dtype=jnp.float32) - 0.1
    y_cf2 = jax.block_until_ready(ln_cf2(x_cf2))
    assert jnp.allclose(y_cf2, _ref_channels_first(x_cf2, ln_cf2.weight, ln_cf2.bias, ln_cf2.eps), **TOL)

    # 3) channels_first with a larger batch so the batch-folded block path (nb > 1)
    #    and the >=4-step grid split are both exercised.
    C3 = 64
    x_cf3 = jax.random.normal(k3, (8, C3, 32, 32), dtype=jnp.float32)
    ln_cf3 = LayerNormPallas(C3, eps=1e-6, data_format="channels_first")
    ln_cf3.weight = 1.0 + 0.01 * jnp.arange(C3, dtype=jnp.float32)
    ln_cf3.bias = 0.005 * jnp.arange(C3, dtype=jnp.float32)
    y_cf3 = jax.block_until_ready(ln_cf3(x_cf3))
    assert jnp.allclose(y_cf3, _ref_channels_first(x_cf3, ln_cf3.weight, ln_cf3.bias, ln_cf3.eps), **TOL)

    # 4) channels_last with small C=32 -> lane-packed path (4 groups per 128-lane row).
    C4 = 32
    x_cl = jax.random.normal(k4, (2, 16, 16, C4), dtype=jnp.float32)
    ln_cl = LayerNormPallas(C4, eps=1e-6, data_format="channels_last")
    ln_cl.weight = 1.0 + 0.03 * jnp.arange(C4, dtype=jnp.float32)
    ln_cl.bias = 0.02 * jnp.arange(C4, dtype=jnp.float32) - 0.3
    y_cl = jax.block_until_ready(ln_cl(x_cl))
    assert jnp.allclose(y_cl, _ref_channels_last(x_cl, ln_cl.weight, ln_cl.bias, ln_cl.eps), **TOL)

    # 5) channels_last with C=36 (does not divide 128) and a row count that is not a
    #    multiple of k -> relaxed packing gate + padded tail path.
    C5 = 36
    x_cl2 = jax.random.normal(k5, (2, 7, 11, C5), dtype=jnp.float32)
    ln_cl2 = LayerNormPallas(C5, eps=1e-6, data_format="channels_last")
    ln_cl2.weight = 1.0 + 0.02 * jnp.arange(C5, dtype=jnp.float32)
    ln_cl2.bias = 0.01 * jnp.arange(C5, dtype=jnp.float32) - 0.05
    y_cl2 = jax.block_until_ready(ln_cl2(x_cl2))
    assert jnp.allclose(y_cl2, _ref_channels_last(x_cl2, ln_cl2.weight, ln_cl2.bias, ln_cl2.eps), **TOL)

    # 6) channels_last in bf16 -> dtype-aware (16-row) sublane rounding.
    C6 = 32
    x_bf = jax.random.normal(k6, (2, 8, 8, C6), dtype=jnp.float32).astype(jnp.bfloat16)
    ln_bf = LayerNormPallas(C6, eps=1e-6, data_format="channels_last")
    y_bf = jax.block_until_ready(ln_bf(x_bf))
    ref_bf = _ref_channels_last(x_bf.astype(jnp.float32), ln_bf.weight, ln_bf.bias,
                                ln_bf.eps).astype(jnp.bfloat16)
    assert y_bf.dtype == jnp.bfloat16
    assert jnp.allclose(y_bf.astype(jnp.float32), ref_bf.astype(jnp.float32),
                        atol=2e-2, rtol=2e-2)

    print("KERNEL_OK")
</pallas_src>

<mosaic_0001>
module attributes {stable_mosaic.version = 11 : i64} {
  func.func @_ln_channels_first_kernel(%arg0: i32, %arg1: i32, %arg2: memref<1x64x128xf32, #tpu.memory_space<vmem>>, %arg3: memref<1x64x1xf32, #tpu.memory_space<vmem>>, %arg4: memref<1x64x1xf32, #tpu.memory_space<vmem>>, %arg5: memref<1x64x128xf32, #tpu.memory_space<vmem>>) attributes {dimension_semantics = [#tpu.dimension_semantics<parallel>, #tpu.dimension_semantics<parallel>], iteration_bounds = array<i64: 2, 2>, scalar_prefetch = 0 : i64, scratch_operands = 0 : i64, tpu.core_type = #tpu.core_type<tc>, window_params = [{transform_indices = @transform_0, window_bounds = array<i64: 1, 64, 128>}, {pipeline_mode = #tpu.pipeline_mode<synchronous>, transform_indices = @transform_1, window_bounds = array<i64: 1, 64, 1>}, {pipeline_mode = #tpu.pipeline_mode<synchronous>, transform_indices = @transform_2, window_bounds = array<i64: 1, 64, 1>}, {transform_indices = @transform_3, window_bounds = array<i64: 1, 64, 128>}]} {
    %c0 = arith.constant 0 : index
    %c0_0 = arith.constant 0 : index
    %c0_1 = arith.constant 0 : index
    %0 = vector.load %arg2[%c0, %c0_0, %c0_1] : memref<1x64x128xf32, #tpu.memory_space<vmem>>, vector<1x64x128xf32>
    %cst = arith.constant dense<0.000000e+00> : vector<1x128xf32>
    %1 = vector.multi_reduction <add>, %0, %cst [1] : vector<1x64x128xf32> to vector<1x128xf32>
    %2 = vector.shape_cast %1 : vector<1x128xf32> to vector<1x1x128xf32>
    %cst_2 = arith.constant 1.562500e-02 : f32
    %3 = vector.broadcast %cst_2 : f32 to vector<1x1x128xf32>
    %4 = arith.mulf %2, %3 : vector<1x1x128xf32>
    %5 = arith.mulf %0, %0 : vector<1x64x128xf32>
    %cst_3 = arith.constant dense<0.000000e+00> : vector<1x128xf32>
    %6 = vector.multi_reduction <add>, %5, %cst_3 [1] : vector<1x64x128xf32> to vector<1x128xf32>
    %7 = vector.shape_cast %6 : vector<1x128xf32> to vector<1x1x128xf32>
    %cst_4 = arith.constant 1.562500e-02 : f32
    %8 = vector.broadcast %cst_4 : f32 to vector<1x1x128xf32>
    %9 = arith.mulf %7, %8 : vector<1x1x128xf32>
    %10 = arith.mulf %4, %4 : vector<1x1x128xf32>
    %11 = arith.subf %9, %10 : vector<1x1x128xf32>
    %cst_5 = arith.constant 0.000000e+00 : f32
    %12 = vector.broadcast %cst_5 : f32 to vector<1x1x128xf32>
    %13 = arith.maximumf %11, %12 : vector<1x1x128xf32>
    %cst_6 = arith.constant 9.99999997E-7 : f32
    %14 = vector.broadcast %cst_6 : f32 to vector<1x1x128xf32>
    %15 = arith.addf %13, %14 : vector<1x1x128xf32>
    %16 = math.rsqrt %15 : vector<1x1x128xf32>
    %17 = vector.broadcast %4 : vector<1x1x128xf32> to vector<1x64x128xf32>
    %18 = arith.subf %0, %17 : vector<1x64x128xf32>
    %19 = vector.broadcast %16 : vector<1x1x128xf32> to vector<1x64x128xf32>
    %20 = arith.mulf %18, %19 : vector<1x64x128xf32>
    %c0_7 = arith.constant 0 : index
    %c0_8 = arith.constant 0 : index
    %c0_9 = arith.constant 0 : index
    %21 = vector.load %arg3[%c0_7, %c0_8, %c0_9] : memref<1x64x1xf32, #tpu.memory_space<vmem>>, vector<1x64x1xf32>
    %22 = vector.broadcast %21 : vector<1x64x1xf32> to vector<1x64x128xf32>
    %23 = arith.mulf %20, %22 : vector<1x64x128xf32>
    %c0_10 = arith.constant 0 : index
    %c0_11 = arith.constant 0 : index
    %c0_12 = arith.constant 0 : index
    %24 = vector.load %arg4[%c0_10, %c0_11, %c0_12] : memref<1x64x1xf32, #tpu.memory_space<vmem>>, vector<1x64x1xf32>
    %25 = vector.broadcast %24 : vector<1x64x1xf32> to vector<1x64x128xf32>
    %26 = arith.addf %23, %25 : vector<1x64x128xf32>
    %c0_13 = arith.constant 0 : index
    %c0_14 = arith.constant 0 : index
    %c0_15 = arith.constant 0 : index
    %27 = vector.load %arg5[%c0_13, %c0_14, %c0_15] : memref<1x64x128xf32, #tpu.memory_space<vmem>>, vector<1x64x128xf32>
    tpu.vector_store %arg5[%c0_13, %c0_14, %c0_15], %26 {strides = array<i32>} : memref<1x64x128xf32, #tpu.memory_space<vmem>>, vector<1x64x128xf32>,
    return
  }
  func.func @transform_0(%arg0: i32, %arg1: i32) -> (i32, i32, i32) {
    %c0_i32 = arith.constant 0 : i32
    %c0_i32_0 = arith.constant 0 : i32
    return %arg0, %c0_i32, %arg1 : i32, i32, i32
  }
  func.func @transform_1(%arg0: i32, %arg1: i32) -> (i32, i32, i32) {
    %c0_i32 = arith.constant 0 : i32
    %c0_i32_0 = arith.constant 0 : i32
    %c0_i32_1 = arith.constant 0 : i32
    %c0_i32_2 = arith.constant 0 : i32
    return %c0_i32, %c0_i32_0, %c0_i32_1 : i32, i32, i32
  }
  func.func @transform_2(%arg0: i32, %arg1: i32) -> (i32, i32, i32) {
    %c0_i32 = arith.constant 0 : i32
    %c0_i32_0 = arith.constant 0 : i32
    %c0_i32_1 = arith.constant 0 : i32
    %c0_i32_2 = arith.constant 0 : i32
    return %c0_i32, %c0_i32_0, %c0_i32_1 : i32, i32, i32
  }
  func.func @transform_3(%arg0: i32, %arg1: i32) -> (i32, i32, i32) {
    %c0_i32 = arith.constant 0 : i32
    %c0_i32_0 = arith.constant 0 : i32
    return %arg0, %c0_i32, %arg1 : i32, i32, i32
  }
}

</mosaic_0001>

<llo_original>
// kernel: tpu_custom_call.1
$region0: #{tpu_custom_call.1}
  #allocation0 [shape = 'u32[]', space=smem, size = 0x4, offset = 0x4, fixed_abs, tag = 'smem constant byte address 0x4 - core index']
  #allocation1 [shape = 'u32[144,128]{1,0:T(1,128)}', space=vmem, size = 0x12000, scoped, tag = 'internal scratch']
  %s0 = inlined_call_operand.hbm [shape: f32[2,64,256], index: 0, kind: input, shape index: {}]
  %s1 = inlined_call_operand.vmem [shape: f32[1,64,1], index: 1, kind: input, shape index: {}]
  %s2 = inlined_call_operand.vmem [shape: f32[1,64,1], index: 2, kind: input, shape index: {}]
  %s3 = inlined_call_operand.hbm [shape: f32[2,64,256], index: 3, kind: output, shape index: {}]
  %s4 = sld [smem:[#allocation0]]
  $region49: #{tpu_custom_call.1} parent=0
    _
  %s6 = ssub.s32 1, %s4
  %s7 = scalar_select 0, %s6, %s4
  $region1: #{tpu_custom_call.1} parent=0
    #allocation2 [shape = 'u8[65536]{0}', space=vmem, size = 0x10000, scoped, tag = 'input window, operand 0']
    #allocation3 [shape = 's32[2]{0}', space=sflag, size = 0x8, scoped, tag = 'scoped memory for tpu_custom_call.1']
    #allocation4 [shape = 's32[2]{0}', space=sflag, size = 0x8, scoped, tag = 'scoped memory for tpu_custom_call.1']
    #allocation5 [shape = 'u8[65536]{0}', space=vmem, size = 0x10000, scoped, tag = 'output window, operand 0']
    %8 = vsyncpa [#allocation3], 0
    %s9 = scalar_lea.sflag [#allocation3], 1
    %10 = vsyncpa %s9, 0
    %11 = vsyncpa [#allocation4], 0
    %s12 = scalar_lea.sflag [#allocation4], 1
    %13 = vsyncpa %s12, 0
    loop: start=0, step=1, limit=6
    $region2: #{tpu_custom_call.1} parent=1 // loop_pre_header
      _
    $region3: #{tpu_custom_call.1} parent=1 // loop_header
      %s15 = sphi 0, %s19
      %p16 = scmp.ge.s32.totalorder %s15, 6
      %s22 = sphi 0, %s34
      %s23 = sphi 0, %s30
      %s24 = sphi 0, %s22
      %s25 = sphi 0, %s23
      %s26 = sphi 0, %s24
      %s27 = sphi 0, %s25
      %s39 = sphi 0, %s41
      %s42 = sphi 0, %s39
      %s43 = sphi 0, %s42
      %s59 = sphi 0, %s43
      %s63 = sphi 0, %s63
      %s65 = sphi 0, %s63
      %s66 = sphi 0, %s65
      %s80 = sphi 0, %s66
      %s84 = sphi 0, %s84
      %s86 = sphi 0, %s84
      %s87 = sphi 0, %s86
      %s101 = sphi 0, %s87
      %s109 = sphi 0, %s111
      %s112 = sphi 0, %s109
      %s113 = sphi 0, %s112
      %s129 = sphi 0, %s113
    $region4: #{tpu_custom_call.1} parent=1 // loop_header_branch
      %18 = sbr.rel (%p16) target = $region8
    $region5: #{tpu_custom_call.1} parent=1 // loop_body
      %s20 = ssub.s32 %s15, 1
      %s21 = ssub.s32 %s15, 2
      %s28 = sadd.s32 1, %s23
      %p29 = scmp.ge.s32.totalorder %s28, 2
      %s30 = scalar_select %p29, 0, %s28
      %s31 = sadd.s32 1, %s22
      %s32 = scalar_select %p29, %s31, %s22
      %p33 = scmp.ge.s32.totalorder %s32, 2
      %s34 = scalar_select %p33, 0, %s32
      %s35 = ssub.s32 %s22, %s34
      %s36 = ssub.s32 %s23, %s30
      %s37 = sor.u32 %s35, %s36
      %p38 = scmp.eq.s32.totalorder %s37, 0
      %s40 = sadd.s32 %s39, 1
      %s41 = scalar_select %p38, %s39, %s40
      %p44 = pneg %p38
      %p45 = scmp.eq.s32.totalorder %s15, 3
      %p46 = por %p44, %p45
      %p47 = scmp.ne.s32.totalorder %s39, %s42
      %p48 = scmp.eq.s32.totalorder %s15, 0
      %p49 = por %p47, %p48
      %p50 = scmp.ne.s32.totalorder %s39, %s42
      %p51 = scmp.eq.s32.totalorder %s20, 3
      %p52 = por %p50, %p51
      %p53 = scmp.ne.s32.totalorder %s42, %s43
      %p54 = scmp.eq.s32.totalorder %s20, 0
      %p55 = por %p53, %p54
      %p56 = scmp.ne.s32.totalorder %s42, %s43
      %p57 = scmp.eq.s32.totalorder %s21, 3
      %p58 = por %p56, %p57
      %p60 = scmp.ne.s32.totalorder %s43, %s59
      %p61 = scmp.eq.s32.totalorder %s21, 0
      %p62 = por %p60, %p61
      %s64 = sadd.s32 %s63, 1
      %p67 = scmp.eq.s32.totalorder %s15, 3
      %p68 = scmp.ne.s32.totalorder %s63, %s65
      %p69 = scmp.eq.s32.totalorder %s15, 0
      %p70 = por %p68, %p69
      %p71 = scmp.ne.s32.totalorder %s63, %s65
      %p72 = scmp.eq.s32.totalorder %s20, 3
      %p73 = por %p71, %p72
      %p74 = scmp.ne.s32.totalorder %s65, %s66
      %p75 = scmp.eq.s32.totalorder %s20, 0
      %p76 = por %p74, %p75
      %p77 = scmp.ne.s32.totalorder %s65, %s66
      %p78 = scmp.eq.s32.totalorder %s21, 3
      %p79 = por %p77, %p78
      %p81 = scmp.ne.s32.totalorder %s66, %s80
      %p82 = scmp.eq.s32.totalorder %s21, 0
      %p83 = por %p81, %p82
      %s85 = sadd.s32 %s84, 1
      %p88 = scmp.eq.s32.totalorder %s15, 3
      %p89 = scmp.ne.s32.totalorder %s84, %s86
      %p90 = scmp.eq.s32.totalorder %s15, 0
      %p91 = por %p89, %p90
      %p92 = scmp.ne.s32.totalorder %s84, %s86
      %p93 = scmp.eq.s32.totalorder %s20, 3
      %p94 = por %p92, %p93
      %p95 = scmp.ne.s32.totalorder %s86, %s87
      %p96 = scmp.eq.s32.totalorder %s20, 0
      %p97 = por %p95, %p96
      %p98 = scmp.ne.s32.totalorder %s86, %s87
      %p99 = scmp.eq.s32.totalorder %s21, 3
      %p100 = por %p98, %p99
      %p102 = scmp.ne.s32.totalorder %s87, %s101
      %p103 = scmp.eq.s32.totalorder %s21, 0
      %p104 = por %p102, %p103
      %s105 = ssub.s32 %s22, %s34
      %s106 = ssub.s32 %s23, %s30
      %s107 = sor.u32 %s105, %s106
      %p108 = scmp.eq.s32.totalorder %s107, 0
      %s110 = sadd.s32 %s109, 1
      %s111 = scalar_select %p108, %s109, %s110
      %p114 = pneg %p108
      %p115 = scmp.eq.s32.totalorder %s15, 3
      %p116 = por %p114, %p115
      %p117 = scmp.ne.s32.totalorder %s109, %s112
      %p118 = scmp.eq.s32.totalorder %s15, 0
      %p119 = por %p117, %p118
      %p120 = scmp.ne.s32.totalorder %s109, %s112
      %p121 = scmp.eq.s32.totalorder %s20, 3
      %p122 = por %p120, %p121
      %p123 = scmp.ne.s32.totalorder %s112, %s113
      %p124 = scmp.eq.s32.totalorder %s20, 0
      %p125 = por %p123, %p124
      %p126 = scmp.ne.s32.totalorder %s112, %s113
      %p127 = scmp.eq.s32.totalorder %s21, 3
      %p128 = por %p126, %p127
      %p130 = scmp.ne.s32.totalorder %s113, %s129
      %p131 = scmp.eq.s32.totalorder %s21, 0
      %p132 = por %p130, %p131
      %p133 = scmp.le.s32.totalorder 1, %s15
      %p134 = scmp.lt.s32.totalorder %s15, 5
      %p135 = pnand %p133, %p134
      %p136 = pneg %p135
      // Predicated region
      $region9: #{tpu_custom_call.1} parent=5 // pred_check
        _
      $region10: #{tpu_custom_call.1} parent=5 // pred_check_branch
        %138 = sbr.rel (%p135) target = $region12
      $region11: #{tpu_custom_call.1} parent=5 // pred_region
        %s139 = ssub.s32 %s15, 1
        // Predicated region
        $region13: #{tpu_custom_call.1} parent=11 // pred_check
          %p140 = pneg %p76
        $region14: #{tpu_custom_call.1} parent=11 // pred_check_branch
          %142 = sbr.rel (%p140) target = $region16
        $region15: #{tpu_custom_call.1} parent=11 // pred_region
          _
        $region16: #{tpu_custom_call.1} parent=11 // pred_fallthru
          _
        // Predicated region
        $region17: #{tpu_custom_call.1} parent=11 // pred_check
          %p143 = pneg %p97
        $region18: #{tpu_custom_call.1} parent=11 // pred_check_branch
          %145 = sbr.rel (%p143) target = $region20
        $region19: #{tpu_custom_call.1} parent=11 // pred_region
          _
        $region20: #{tpu_custom_call.1} parent=11 // pred_fallthru
          _
      $region12: #{tpu_custom_call.1} parent=5 // pred_fallthru
        _
      %p146 = scmp.lt.s32.totalorder %s15, 4
      // Predicated region
      $region21: #{tpu_custom_call.1} parent=5 // pred_check
        %p147 = pneg %p146
      $region22: #{tpu_custom_call.1} parent=5 // pred_check_branch
        %149 = sbr.rel (%p147) target = $region24
      $region23: #{tpu_custom_call.1} parent=5 // pred_region
        // Predicated region
        $region25: #{tpu_custom_call.1} parent=23 // pred_check
          %p150 = pneg %p49
        $region26: #{tpu_custom_call.1} parent=23 // pred_check_branch
          %152 = sbr.rel (%p150) target = $region28
        $region27: #{tpu_custom_call.1} parent=23 // pred_region
          %s153 = sand.u32 %s39, 1
          %s154 = scalar_lea.sflag [#allocation3], %s153
          %s155 = sand.u32 %s39, 1
          %s156 = smul.addr %s155, 64
          %s157 = scalar_lea.vmem [#allocation2], %s156
          %s159 = ssub.s32 1024, 1024
          %160 = vsyncadd %s154, %s159
          %s161 = smul.addr %s22, 16
          %s162 = sadd.s32 %s23, %s161
          %s163 = smul.addr %s162, 128
          %s164 = scalar_lea.hbm %s0, %s163
          %s165 = sshll.u32 %s157, 4
          %s166 = int_to_ptr.vmem [resolvable:$true] %s165
          %171 = dma.hbm_to_vmem [thread:$0]  %s164, 1024, %s166, %s154, 256, 128, 8
        $region28: #{tpu_custom_call.1} parent=23 // pred_fallthru
          _
      $region24: #{tpu_custom_call.1} parent=5 // pred_fallthru
        _
      %p172 = scmp.le.s32.totalorder 1, %s15
      %p173 = scmp.lt.s32.totalorder %s15, 5
      %p174 = pnand %p172, %p173
      %p175 = pneg %p174
      // Predicated region
      $region29: #{tpu_custom_call.1} parent=5 // pred_check
        _
      $region30: #{tpu_custom_call.1} parent=5 // pred_check_branch
        %177 = sbr.rel (%p174) target = $region32
      $region31: #{tpu_custom_call.1} parent=5 // pred_region
        %s178 = ssub.s32 %s15, 1
        %s179 = sand.u32 %s42, 1
        %s180 = scalar_lea.sflag [#allocation3], %s179
        %s181 = sand.u32 %s42, 1
        %s182 = smul.addr %s181, 64
        %s183 = scalar_lea.vmem [#allocation2], %s182
        // Predicated region
        $region33: #{tpu_custom_call.1} parent=31 // pred_check
          %p184 = pneg %p55
        $region34: #{tpu_custom_call.1} parent=31 // pred_check_branch
          %186 = sbr.rel (%p184) target = $region36
        $region35: #{tpu_custom_call.1} parent=31 // pred_region
          %187 = dma.done %s180, 1024
        $region36: #{tpu_custom_call.1} parent=31 // pred_fallthru
          _
        %s188 = sand.u32 %s42, 1
        %s189 = scalar_lea.sflag [#allocation3], %s188
        %s190 = sand.u32 %s42, 1
        %s191 = smul.addr %s190, 64
        %s192 = scalar_lea.vmem [#allocation2], %s191
        %p193 = pneg %p55
        %p194 = pneg %p52
        %p195 = pneg %p76
        %p196 = pneg %p73
        %p197 = pneg %p97
        %p198 = pneg %p94
        %p199 = pneg %p125
        %p200 = pneg %p122
        %s201 = sand.u32 %s112, 1
        %s202 = scalar_lea.sflag [#allocation4], %s201
        %s203 = sand.u32 %s112, 1
        %s204 = smul.addr %s203, 64
        %s205 = scalar_lea.vmem [#allocation5], %s204
        %v206 = vld [vmem:[%s183] sm:$0xff]
        %v207 = vld [vmem:[%s183 + $0x8] sm:$0xff]
        %v208 = vld [vmem:[%s183 + $0x10] sm:$0xff]
        %v209 = vld [vmem:[%s183 + $0x18] sm:$0xff]
        %v210 = vld [vmem:[%s183 + $0x20] sm:$0xff]
        %v211 = vld [vmem:[%s183 + $0x28] sm:$0xff]
        %v212 = vld [vmem:[%s183 + $0x30] sm:$0xff]
        %v213 = vld [vmem:[%s183 + $0x38] sm:$0xff]
        %v214 = vadd.f32 %v206, %v207
        %v215 = vadd.f32 %v214, %v208
        %v216 = vadd.f32 %v215, %v209
        %v217 = vadd.f32 %v216, %v210
        %v218 = vadd.f32 %v217, %v211
        %v219 = vadd.f32 %v218, %v212
        %v220 = vadd.f32 %v219, %v213
        %v221 = vrot.slane %v220, 4
        %v222 = vadd.f32 %v220, %v221
        %v223 = vrot.slane %v222, 2
        %v224 = vadd.f32 %v222, %v223
        %v225 = vrot.slane %v224, 1
        %v226 = vadd.f32 %v224, %v225
        %v227 = vmul.f32 %v226, 0.015625
        %v228 = vmul.f32 %v206, %v206
        %v229 = vmul.f32 %v207, %v207
        %v230 = vmul.f32 %v208, %v208
        %v231 = vmul.f32 %v209, %v209
        %v232 = vmul.f32 %v210, %v210
        %v233 = vmul.f32 %v211, %v211
        %v234 = vmul.f32 %v212, %v212
        %v235 = vmul.f32 %v213, %v213
        %v236 = vadd.f32 %v228, %v229
        %v237 = vadd.f32 %v236, %v230
        %v238 = vadd.f32 %v237, %v231
        %v239 = vadd.f32 %v238, %v232
        %v240 = vadd.f32 %v239, %v233
        %v241 = vadd.f32 %v240, %v234
        %v242 = vadd.f32 %v241, %v235
        %v243 = vrot.slane %v242, 4
        %v244 = vadd.f32 %v242, %v243
        %v245 = vrot.slane %v244, 2
        %v246 = vadd.f32 %v244, %v245
        %v247 = vrot.slane %v246, 1
        %v248 = vadd.f32 %v246, %v247
        %v249 = vmul.f32 %v248, 0.015625
        %v250 = vmul.f32 %v227, %v227
        %v251 = vsub.f32 %v249, %v250
        %v252 = vmax.f32 %v251, 0.0
        %v253 = vadd.f32 %v252, 1e-06
        %v254 = vrsqrt.pop %v253
        %v255 = vsub.f32 %v206, %v227
        %v256 = vsub.f32 %v207, %v227
        %v257 = vsub.f32 %v208, %v227
        %v258 = vsub.f32 %v209, %v227
        %v259 = vsub.f32 %v210, %v227
        %v260 = vsub.f32 %v211, %v227
        %v261 = vsub.f32 %v212, %v227
        %v262 = vsub.f32 %v213, %v227
        %v263 = vmul.f32 %v255, %v254
        %v264 = vmul.f32 %v256, %v254
        %v265 = vmul.f32 %v257, %v254
        %v266 = vmul.f32 %v258, %v254
        %v267 = vmul.f32 %v259, %v254
        %v268 = vmul.f32 %v260, %v254
        %v269 = vmul.f32 %v261, %v254
        %v270 = vmul.f32 %v262, %v254
        %v271 = vld [vmem:[%s1] sm:$0xff]
        %v272 = vld [vmem:[%s1 + $0x8] sm:$0xff]
        %v273 = vld [vmem:[%s1 + $0x10] sm:$0xff]
        %v274 = vld [vmem:[%s1 + $0x18] sm:$0xff]
        %v275 = vld [vmem:[%s1 + $0x20] sm:$0xff]
        %v276 = vld [vmem:[%s1 + $0x28] sm:$0xff]
        %v277 = vld [vmem:[%s1 + $0x30] sm:$0xff]
        %v278 = vld [vmem:[%s1 + $0x38] sm:$0xff]
        %280 = vset.pattern.permute.xlu0 0
        %281 = vperm.xlu0 %280, %v271
        %v282 = vpop.permute.xlu0 %281
        %285 = vset.pattern.permute.xlu0 0
        %286 = vperm.xlu0 %285, %v272
        %v287 = vpop.permute.xlu0 %286
        %290 = vset.pattern.permute.xlu0 0
        %291 = vperm.xlu0 %290, %v273
        %v292 = vpop.permute.xlu0 %291
        %295 = vset.pattern.permute.xlu0 0
        %296 = vperm.xlu0 %295, %v274
        %v297 = vpop.permute.xlu0 %296
        %300 = vset.pattern.permute.xlu0 0
        %301 = vperm.xlu0 %300, %v275
        %v302 = vpop.permute.xlu0 %301
        %305 = vset.pattern.permute.xlu0 0
        %306 = vperm.xlu0 %305, %v276
        %v307 = vpop.permute.xlu0 %306
        %310 = vset.pattern.permute.xlu0 0
        %311 = vperm.xlu0 %310, %v277
        %v312 = vpop.permute.xlu0 %311
        %315 = vset.pattern.permute.xlu0 0
        %316 = vperm.xlu0 %315, %v278
        %v317 = vpop.permute.xlu0 %316
        %v319 = vmul.f32 %v263, %v282
        %v320 = vmul.f32 %v264, %v287
        %v321 = vmul.f32 %v265, %v292
        %v322 = vmul.f32 %v266, %v297
        %v323 = vmul.f32 %v267, %v302
        %v324 = vmul.f32 %v268, %v307
        %v325 = vmul.f32 %v269, %v312
        %v326 = vmul.f32 %v270, %v317
        %v327 = vld [vmem:[%s2] sm:$0xff]
        %v328 = vld [vmem:[%s2 + $0x8] sm:$0xff]
        %v329 = vld [vmem:[%s2 + $0x10] sm:$0xff]
        %v330 = vld [vmem:[%s2 + $0x18] sm:$0xff]
        %v331 = vld [vmem:[%s2 + $0x20] sm:$0xff]
        %v332 = vld [vmem:[%s2 + $0x28] sm:$0xff]
        %v333 = vld [vmem:[%s2 + $0x30] sm:$0xff]
        %v334 = vld [vmem:[%s2 + $0x38] sm:$0xff]
        %336 = vset.pattern.permute.xlu0 0
        %337 = vperm.xlu0 %336, %v327
        %v338 = vpop.permute.xlu0 %337
        %341 = vset.pattern.permute.xlu0 0
        %342 = vperm.xlu0 %341, %v328
        %v343 = vpop.permute.xlu0 %342
        %346 = vset.pattern.permute.xlu0 0
        %347 = vperm.xlu0 %346, %v329
        %v348 = vpop.permute.xlu0 %347
        %351 = vset.pattern.permute.xlu0 0
        %352 = vperm.xlu0 %351, %v330
        %v353 = vpop.permute.xlu0 %352
        %356 = vset.pattern.permute.xlu0 0
        %357 = vperm.xlu0 %356, %v331
        %v358 = vpop.permute.xlu0 %357
        %361 = vset.pattern.permute.xlu0 0
        %362 = vperm.xlu0 %361, %v332
        %v363 = vpop.permute.xlu0 %362
        %366 = vset.pattern.permute.xlu0 0
        %367 = vperm.xlu0 %366, %v333
        %v368 = vpop.permute.xlu0 %367
        %371 = vset.pattern.permute.xlu0 0
        %372 = vperm.xlu0 %371, %v334
        %v373 = vpop.permute.xlu0 %372
        %v375 = vadd.f32 %v319, %v338
        %v376 = vadd.f32 %v320, %v343
        %v377 = vadd.f32 %v321, %v348
        %v378 = vadd.f32 %v322, %v353
        %v379 = vadd.f32 %v323, %v358
        %v380 = vadd.f32 %v324, %v363
        %v381 = vadd.f32 %v325, %v368
        %v382 = vadd.f32 %v326, %v373
        %383 = vst [vmem:[%s205] sm:$0xff] %v375
        %384 = vst [vmem:[%s205 + $0x8] sm:$0xff] %v376
        %385 = vst [vmem:[%s205 + $0x10] sm:$0xff] %v377
        %386 = vst [vmem:[%s205 + $0x18] sm:$0xff] %v378
        %387 = vst [vmem:[%s205 + $0x20] sm:$0xff] %v379
        %388 = vst [vmem:[%s205 + $0x28] sm:$0xff] %v380
        %389 = vst [vmem:[%s205 + $0x30] sm:$0xff] %v381
        %390 = vst [vmem:[%s205 + $0x38] sm:$0xff] %v382
        %s391 = sand.u32 %s112, 1
        %s392 = scalar_lea.sflag [#allocation4], %s391
        %s393 = sand.u32 %s112, 1
        %s394 = smul.addr %s393, 64
        %s395 = scalar_lea.vmem [#allocation5], %s394
        // Predicated region
        $region37: #{tpu_custom_call.1} parent=31 // pred_check
          %p396 = pneg %p122
        $region38: #{tpu_custom_call.1} parent=31 // pred_check_branch
          %398 = sbr.rel (%p396) target = $region40
        $region39: #{tpu_custom_call.1} parent=31 // pred_region
          %s400 = ssub.s32 1024, 1024
          %401 = vsyncadd %s392, %s400
          %s402 = smul.addr %s24, 16
          %s403 = sadd.s32 %s25, %s402
          %s404 = smul.addr %s403, 128
          %s405 = scalar_lea.hbm %s3, %s404
          %s406 = sshll.u32 %s395, 4
          %s407 = int_to_ptr.vmem [resolvable:$true] %s406
          %412 = dma.vmem_to_hbm [thread:$0]  %s407, 1024, %s405, %s392, 128, 256, 8
        $region40: #{tpu_custom_call.1} parent=31 // pred_fallthru
          _
      $region32: #{tpu_custom_call.1} parent=5 // pred_fallthru
        _
      %p413 = scmp.le.s32.totalorder 2, %s15
      // Predicated region
      $region41: #{tpu_custom_call.1} parent=5 // pred_check
        %p414 = pneg %p413
      $region42: #{tpu_custom_call.1} parent=5 // pred_check_branch
        %416 = sbr.rel (%p414) target = $region44
      $region43: #{tpu_custom_call.1} parent=5 // pred_region
        %s417 = ssub.s32 %s15, 2
        // Predicated region
        $region45: #{tpu_custom_call.1} parent=43 // pred_check
          %p418 = pneg %p128
        $region46: #{tpu_custom_call.1} parent=43 // pred_check_branch
          %420 = sbr.rel (%p418) target = $region48
        $region47: #{tpu_custom_call.1} parent=43 // pred_region
          %s421 = sand.u32 %s113, 1
          %s422 = scalar_lea.sflag [#allocation4], %s421
          %s423 = sand.u32 %s113, 1
          %s424 = smul.addr %s423, 64
          %s425 = scalar_lea.vmem [#allocation5], %s424
          %426 = dma.done %s422, 1024
        $region48: #{tpu_custom_call.1} parent=43 // pred_fallthru
          _
      $region44: #{tpu_custom_call.1} parent=5 // pred_fallthru
        _
    $region6: #{tpu_custom_call.1} parent=1 // loop_footer
      %s19 = sadd.s32 1, %s15
    $region7: #{tpu_custom_call.1} parent=1 // loop_footer_branch
      %14 = sbr.rel target = $region3
    $region8: #{tpu_custom_call.1} parent=1 // loop_exit
      _
    %427 = vsyncpa [#allocation3], 1
    %s428 = scalar_lea.sflag [#allocation3], 1
    %429 = vsyncpa %s428, 1
    %430 = vsyncpa [#allocation4], 1
    %s431 = scalar_lea.sflag [#allocation4], 1
    %432 = vsyncpa %s431, 1

</llo_original>
